<compile_context>
chip_gen: v7x
topology: tpu7x:2x2x1
jax: 0.10.0
libtpu: 0.0.40
codegen_flags: <defaults>
</compile_context>

<pallas_src>
import functools

import numpy as np
import jax
import jax.numpy as jnp
from jax.experimental import pallas as pl
from jax.experimental.pallas import tpu as pltpu


def _round_up(x, m):
    return (x + m - 1) // m * m


def _pick_tm(m, requested):
    """M tile: keep padding waste small; when M >= 16 ensure >= 2 grid steps
    over M so v7x's 2 TensorCores both get work (harmless on v5e/v6e)."""
    m8 = _round_up(max(m, 1), 8)
    tm_req = max(8, _round_up(min(requested, m8), 8))
    steps = pl.cdiv(m8, tm_req)
    if m8 >= 16:
        steps = max(steps, 2)
    tm = _round_up(pl.cdiv(m8, steps), 8)
    return tm, tm * steps


# --------------------------- single EncodeBlock ------------------------------

def _encode_block_kernel_fused_out(x_ref, w_ref, b_ref, o_ref, *, apply_relu):
    # f32 output: accumulate directly into the K-invariant (VMEM-resident)
    # output block -- no scratch accumulator, no finalize copy.
    k = pl.program_id(2)

    @pl.when(k == 0)
    def _():
        o_ref[...] = jnp.zeros_like(o_ref)

    o_ref[...] += jnp.dot(x_ref[...], w_ref[...],
                          preferred_element_type=jnp.float32)

    @pl.when(k == pl.num_programs(2) - 1)
    def _():
        y = o_ref[...] + b_ref[...]
        if apply_relu:
            y = jnp.maximum(y, 0.0)
        o_ref[...] = y


def _encode_block_kernel_scratch(x_ref, w_ref, b_ref, o_ref, acc_ref, *,
                                 apply_relu):
    # Non-f32 output: keep an f32 VMEM accumulator, cast once at the end.
    k = pl.program_id(2)

    @pl.when(k == 0)
    def _():
        acc_ref[...] = jnp.zeros_like(acc_ref)

    acc_ref[...] += jnp.dot(x_ref[...], w_ref[...],
                            preferred_element_type=jnp.float32)

    @pl.when(k == pl.num_programs(2) - 1)
    def _():
        y = acc_ref[...] + b_ref[...]
        if apply_relu:
            y = jnp.maximum(y, 0.0)
        o_ref[...] = y.astype(o_ref.dtype)


def prepare_encode_block(weight, bias, *, compute_dtype=jnp.float32,
                         tn=512, tk=1024):
    """One-time preparation of nn.Linear parameters (amortized over calls).

    weight: (out_dims, in_dims)  PyTorch layout
    bias:   (out_dims,)

    Transposes to (in, out) so the MXU consumes a (K, N) operand directly,
    zero-pads feature dims to lane-dense tile multiples, casts to
    compute_dtype (bf16 halves weight HBM traffic; f32 acc is kept in-kernel).
    """
    n, k = weight.shape
    tk = max(128, min(_round_up(tk, 128), _round_up(k, 128)))
    tn = max(128, min(_round_up(tn, 128), _round_up(n, 128)))
    kp = _round_up(k, tk)
    np_ = _round_up(n, tn)
    w_t = jnp.pad(weight.T.astype(compute_dtype), ((0, kp - k), (0, np_ - n)))
    b_row = jnp.pad(bias.astype(jnp.float32), (0, np_ - n)).reshape(1, np_)
    return {"w": w_t, "b": b_row, "in_dims": k, "out_dims": n,
            "kp": kp, "np": np_, "tk": tk, "tn": tn,
            "compute_dtype": compute_dtype}


def encode_block(x, params, *, is_last, tm=256):
    """Forward of one EncodeBlock: y = x @ W.T + b, ReLU unless is_last."""
    m, k = x.shape
    assert k == params["in_dims"], "in_dims mismatch"
    out_dtype = x.dtype
    compute_dtype = params["compute_dtype"]
    tk, tn = params["tk"], params["tn"]
    kp, np_ = params["kp"], params["np"]
    n = params["out_dims"]

    tm, mp = _pick_tm(m, tm)

    # Only the activation is padded/cast per call (weights prepared once).
    x_p = jnp.pad(x.astype(compute_dtype), ((0, mp - m), (0, kp - k)))

    grid = (mp // tm, np_ // tn, kp // tk)   # reduction axis (K) last

    cb = np.dtype(compute_dtype).itemsize
    ob = np.dtype(out_dtype).itemsize
    fuse_out = np.dtype(out_dtype) == np.dtype(np.float32)

    cost = pl.CostEstimate(
        flops=2 * mp * np_ * kp,
        transcendentals=0,
        bytes_accessed=mp * kp * cb + kp * np_ * cb + np_ * 4 + mp * np_ * ob,
    )
    vmem_est = 2 * (tm * tk * cb + tk * tn * cb + tn * 4 + tm * tn * ob)
    if not fuse_out:
        vmem_est += tm * tn * 4
    vmem_limit = min(max(2 * vmem_est + (4 << 20), 32 << 20), 64 << 20)

    common = dict(
        out_shape=jax.ShapeDtypeStruct((mp, np_), out_dtype),
        grid=grid,
        in_specs=[
            pl.BlockSpec((tm, tk), lambda i, j, kk: (i, kk)),
            pl.BlockSpec((tk, tn), lambda i, j, kk: (kk, j)),
            pl.BlockSpec((1, tn), lambda i, j, kk: (0, j)),   # K-invariant bias
        ],
        out_specs=pl.BlockSpec((tm, tn), lambda i, j, kk: (i, j)),
        compiler_params=pltpu.CompilerParams(
            dimension_semantics=("parallel", "parallel", "arbitrary"),
            vmem_limit_bytes=vmem_limit,
        ),
        cost_estimate=cost,
    )

    if fuse_out:
        out_p = pl.pallas_call(
            functools.partial(_encode_block_kernel_fused_out,
                              apply_relu=not is_last),
            **common,
        )(x_p, params["w"], params["b"])
    else:
        out_p = pl.pallas_call(
            functools.partial(_encode_block_kernel_scratch,
                              apply_relu=not is_last),
            scratch_shapes=[pltpu.VMEM((tm, tn), jnp.float32)],
            **common,
        )(x_p, params["w"], params["b"])

    if mp != m or np_ != n:
        out_p = out_p[:m, :n]
    return out_p


# ------------------- fused stack of EncodeBlocks (one call) ------------------

def _encode_stack_kernel(x_ref, *refs, num_layers, relu_flags):
    w_refs = refs[:num_layers]
    b_refs = refs[num_layers:2 * num_layers]
    o_ref = refs[2 * num_layers]

    h = x_ref[...]
    for l in range(num_layers):
        # Weights are already (K, N): plain dot, no in-kernel transposes.
        h = jnp.dot(h.astype(w_refs[l].dtype), w_refs[l][...],
                    preferred_element_type=jnp.float32)
        h = h + b_refs[l][...]
        if relu_flags[l]:
            h = jnp.maximum(h, 0.0)
    o_ref[...] = h.astype(o_ref.dtype)


def prepare_encode_stack(weights, biases, is_last_flags, *,
                         compute_dtype=jnp.float32):
    """One-time preparation of a stack of EncodeBlocks (transpose+pad+cast)."""
    num_layers = len(weights)
    dims = [weights[0].shape[1]] + [w.shape[0] for w in weights]
    pdims = [_round_up(d, 128) for d in dims]     # lane-dense feature dims
    w_ts, b_rows = [], []
    for l, (w, b) in enumerate(zip(weights, biases)):
        n_l, k_l = w.shape
        w_ts.append(jnp.pad(w.T.astype(compute_dtype),
                            ((0, pdims[l] - k_l), (0, pdims[l + 1] - n_l))))
        b_rows.append(jnp.pad(b.astype(jnp.float32),
                              (0, pdims[l + 1] - n_l)).reshape(1, pdims[l + 1]))
    return {"w": tuple(w_ts), "b": tuple(b_rows),
            "dims": tuple(dims), "pdims": tuple(pdims),
            "relu": tuple(not last for last in is_last_flags),
            "compute_dtype": compute_dtype, "num_layers": num_layers}


def encode_block_stack(x, stack, *, tm=256):
    """Fused forward of a stack of EncodeBlocks in one pallas_call.

    Activations stay in VMEM between layers (no HBM round-trips, one launch).
    Weights are assumed VMEM-resident (single-buffered when supported).
    """
    m, k0 = x.shape
    assert k0 == stack["dims"][0], "in_dims mismatch"
    out_dtype = x.dtype
    compute_dtype = stack["compute_dtype"]
    pdims = stack["pdims"]
    num_layers = stack["num_layers"]

    tm, mp = _pick_tm(m, tm)
    x_p = jnp.pad(x.astype(compute_dtype), ((0, mp - m), (0, pdims[0] - k0)))

    cb = np.dtype(compute_dtype).itemsize
    ob = np.dtype(out_dtype).itemsize
    flops = sum(2 * mp * pdims[l] * pdims[l + 1] for l in range(num_layers))
    w_bytes = sum(pdims[l] * pdims[l + 1] * cb for l in range(num_layers))
    b_bytes = sum(pdims[l + 1] * 4 for l in range(num_layers))
    cost = pl.CostEstimate(
        flops=flops, transcendentals=0,
        bytes_accessed=mp * pdims[0] * cb + w_bytes + b_bytes
        + mp * pdims[-1] * ob,
    )
    vmem_est = (w_bytes + b_bytes + 2 * tm * pdims[0] * cb
                + 2 * tm * pdims[-1] * ob + tm * max(pdims) * 4)
    vmem_limit = min(max(2 * vmem_est + (4 << 20), 32 << 20), 64 << 20)

    kernel = functools.partial(_encode_stack_kernel,
                               num_layers=num_layers,
                               relu_flags=stack["relu"])

    def _call(single_buffer_weights):
        if single_buffer_weights:
            # Grid-invariant weights/biases: single-buffer them. Halves their
            # VMEM footprint -- matters on v7x (32 MiB scoped / 64 MiB phys).
            def wspec(shape):
                return pl.BlockSpec(shape, lambda i: (0, 0),
                                    pipeline_mode=pl.Buffered(1))
        else:
            def wspec(shape):
                return pl.BlockSpec(shape, lambda i: (0, 0))

        in_specs = [pl.BlockSpec((tm, pdims[0]), lambda i: (i, 0))]
        for l in range(num_layers):
            in_specs.append(wspec((pdims[l], pdims[l + 1])))
        for l in range(num_layers):
            in_specs.append(wspec((1, pdims[l + 1])))

        out = pl.pallas_call(
            kernel,
            out_shape=jax.ShapeDtypeStruct((mp, pdims[-1]), out_dtype),
            grid=(mp // tm,),
            in_specs=in_specs,
            out_specs=pl.BlockSpec((tm, pdims[-1]), lambda i: (i, 0)),
            compiler_params=pltpu.CompilerParams(
                dimension_semantics=("parallel",),
                vmem_limit_bytes=vmem_limit,
            ),
            cost_estimate=cost,
        )(x_p, *stack["w"], *stack["b"])
        return out

    try:
        out_p = _call(True)
        jax.block_until_ready(out_p)
    except Exception:
        # Fallback for jax versions without BlockSpec(pipeline_mode=...):
        # default double-buffering, correctness unaffected.
        out_p = _call(False)

    n_out = stack["dims"][-1]
    if mp != m or pdims[-1] != n_out:
        out_p = out_p[:m, :n_out]
    return out_p


# --------------------------------- reference ---------------------------------

def _reference_block(x, weight, bias, is_last):
    y = x @ weight.T + bias
    if not is_last:
        y = jnp.maximum(y, 0.0)
    return y


def _reference_stack(x, weights, biases, is_last_flags):
    h = x
    for w, b, last in zip(weights, biases, is_last_flags):
        h = _reference_block(h, w, b, last)
    return h


if __name__ == "__main__":
    key = jax.random.PRNGKey(0)
    keys = jax.random.split(key, 8)

    batch, in_dims, out_dims = 8, 32, 16

    x = jax.random.normal(keys[0], (batch, in_dims), dtype=jnp.float32)
    weight = jax.random.normal(keys[1], (out_dims, in_dims), jnp.float32) * 0.1
    bias = jax.random.normal(keys[2], (out_dims,), jnp.float32) * 0.1

    # --- single EncodeBlock, f32 MXU operands (exact path) ---
    params_f32 = prepare_encode_block(weight, bias, compute_dtype=jnp.float32)

    y0 = encode_block(x, params_f32, is_last=False)
    jax.block_until_ready(y0)
    ref0 = _reference_block(x, weight, bias, is_last=False)
    assert y0.shape == ref0.shape
    assert jnp.allclose(y0, ref0, atol=1e-5, rtol=1e-5)

    y1 = encode_block(x, params_f32, is_last=True)
    jax.block_until_ready(y1)
    ref1 = _reference_block(x, weight, bias, is_last=True)
    assert jnp.allclose(y1, ref1, atol=1e-5, rtol=1e-5)

    # --- single EncodeBlock, bf16 MXU operands (mem-bound fast path) ---
    # NOTE: operand precision is intentionally reduced; accumulation stays f32.
    params_bf16 = prepare_encode_block(weight, bias, compute_dtype=jnp.bfloat16)
    yb = encode_block(x, params_bf16, is_last=False)
    jax.block_until_ready(yb)
    assert jnp.allclose(yb, ref0, atol=5e-2, rtol=5e-2)

    # --- fused 3-block stack (activations stay in VMEM between layers) ---
    hidden = 64
    weights = [
        weight,                                                                # 32 -> 16
        jax.random.normal(keys[3], (hidden, out_dims), jnp.float32) * 0.1,     # 16 -> 64
        jax.random.normal(keys[4], (out_dims, hidden), jnp.float32) * 0.1,     # 64 -> 16
    ]
    biases = [
        bias,
        jax.random.normal(keys[5], (hidden,), jnp.float32) * 0.1,
        jax.random.normal(keys[6], (out_dims,), jnp.float32) * 0.1,
    ]
    is_last_flags = [False, False, True]

    stack = prepare_encode_stack(weights, biases, is_last_flags,
                                 compute_dtype=jnp.float32)
    ys = encode_block_stack(x, stack)
    jax.block_until_ready(ys)
    refs = _reference_stack(x, weights, biases, is_last_flags)
    assert jnp.allclose(ys, refs, atol=1e-5, rtol=1e-5)

    print("KERNEL_OK")
</pallas_src>

<mosaic_0001>
module attributes {stable_mosaic.version = 11 : i64} {
  func.func @_encode_block_kernel_fused_out(%arg0: i32, %arg1: i32, %arg2: i32, %arg3: memref<8x128xf32, #tpu.memory_space<vmem>>, %arg4: memref<128x128xf32, #tpu.memory_space<vmem>>, %arg5: memref<1x128xf32, #tpu.memory_space<vmem>>, %arg6: memref<8x128xf32, #tpu.memory_space<vmem>>) attributes {dimension_semantics = [#tpu.dimension_semantics<parallel>, #tpu.dimension_semantics<parallel>, #tpu.dimension_semantics<arbitrary>], iteration_bounds = array<i64: 1, 1, 1>, scalar_prefetch = 0 : i64, scratch_operands = 0 : i64, tpu.core_type = #tpu.core_type<tc>, window_params = [{transform_indices = @transform_0, window_bounds = array<i64: 8, 128>}, {transform_indices = @transform_1, window_bounds = array<i64: 128, 128>}, {transform_indices = @transform_2, window_bounds = array<i64: 1, 128>}, {transform_indices = @transform_3, window_bounds = array<i64: 8, 128>}]} {
    %c0_i32 = arith.constant 0 : i32
    %0 = arith.cmpi eq, %arg2, %c0_i32 : i32
    %1 = arith.extui %0 : i1 to i32
    %c0_i32_0 = arith.constant 0 : i32
    %2 = arith.cmpi ne, %1, %c0_i32_0 : i32
    scf.if %2 {
      %cst_10 = arith.constant 0.000000e+00 : f32
      %12 = vector.broadcast %cst_10 : f32 to vector<8x128xf32>
      %c0_11 = arith.constant 0 : index
      %c0_12 = arith.constant 0 : index
      %13 = vector.load %arg6[%c0_11, %c0_12] : memref<8x128xf32, #tpu.memory_space<vmem>>, vector<8x128xf32>
      tpu.vector_store %arg6[%c0_11, %c0_12], %12 {strides = array<i32>} : memref<8x128xf32, #tpu.memory_space<vmem>>, vector<8x128xf32>,
    } else {
    }
    %c0 = arith.constant 0 : index
    %c0_1 = arith.constant 0 : index
    %3 = vector.load %arg6[%c0, %c0_1] : memref<8x128xf32, #tpu.memory_space<vmem>>, vector<8x128xf32>
    %c0_2 = arith.constant 0 : index
    %c0_3 = arith.constant 0 : index
    %4 = vector.load %arg3[%c0_2, %c0_3] : memref<8x128xf32, #tpu.memory_space<vmem>>, vector<8x128xf32>
    %c0_4 = arith.constant 0 : index
    %c0_5 = arith.constant 0 : index
    %5 = vector.load %arg4[%c0_4, %c0_5] : memref<128x128xf32, #tpu.memory_space<vmem>>, vector<128x128xf32>
    %cst = arith.constant dense<0.000000e+00> : vector<8x128xf32>
    %6 = tpu.matmul %4, %5, %cst {dimension_numbers = #tpu.dot_dimension_numbers<[1], [0], [0], [1], [0, 0, 1, 1], [], []>} : vector<8x128xf32>, vector<128x128xf32>, vector<8x128xf32> -> vector<8x128xf32>
    %7 = arith.addf %3, %6 : vector<8x128xf32>
    %c0_6 = arith.constant 0 : index
    %c0_7 = arith.constant 0 : index
    %8 = vector.load %arg6[%c0_6, %c0_7] : memref<8x128xf32, #tpu.memory_space<vmem>>, vector<8x128xf32>
    tpu.vector_store %arg6[%c0_6, %c0_7], %7 {strides = array<i32>} : memref<8x128xf32, #tpu.memory_space<vmem>>, vector<8x128xf32>,
    %c0_i32_8 = arith.constant 0 : i32
    %9 = arith.cmpi eq, %arg2, %c0_i32_8 : i32
    %10 = arith.extui %9 : i1 to i32
    %c0_i32_9 = arith.constant 0 : i32
    %11 = arith.cmpi ne, %10, %c0_i32_9 : i32
    scf.if %11 {
      %c0_10 = arith.constant 0 : index
      %c0_11 = arith.constant 0 : index
      %12 = vector.load %arg6[%c0_10, %c0_11] : memref<8x128xf32, #tpu.memory_space<vmem>>, vector<8x128xf32>
      %c0_12 = arith.constant 0 : index
      %c0_13 = arith.constant 0 : index
      %13 = vector.load %arg5[%c0_12, %c0_13] : memref<1x128xf32, #tpu.memory_space<vmem>>, vector<1x128xf32>
      %14 = vector.broadcast %13 : vector<1x128xf32> to vector<8x128xf32>
      %15 = arith.addf %12, %14 : vector<8x128xf32>
      %cst_14 = arith.constant 0.000000e+00 : f32
      %16 = vector.broadcast %cst_14 : f32 to vector<8x128xf32>
      %17 = arith.maximumf %15, %16 : vector<8x128xf32>
      %c0_15 = arith.constant 0 : index
      %c0_16 = arith.constant 0 : index
      %18 = vector.load %arg6[%c0_15, %c0_16] : memref<8x128xf32, #tpu.memory_space<vmem>>, vector<8x128xf32>
      tpu.vector_store %arg6[%c0_15, %c0_16], %17 {strides = array<i32>} : memref<8x128xf32, #tpu.memory_space<vmem>>, vector<8x128xf32>,
    } else {
    }
    return
  }
  func.func @transform_0(%arg0: i32, %arg1: i32, %arg2: i32) -> (i32, i32) {
    %c0_i32 = arith.constant 0 : i32
    return %arg0, %arg2 : i32, i32
  }
  func.func @transform_1(%arg0: i32, %arg1: i32, %arg2: i32) -> (i32, i32) {
    %c0_i32 = arith.constant 0 : i32
    return %arg2, %arg1 : i32, i32
  }
  func.func @transform_2(%arg0: i32, %arg1: i32, %arg2: i32) -> (i32, i32) {
    %c0_i32 = arith.constant 0 : i32
    %c0_i32_0 = arith.constant 0 : i32
    return %c0_i32, %arg1 : i32, i32
  }
  func.func @transform_3(%arg0: i32, %arg1: i32, %arg2: i32) -> (i32, i32) {
    %c0_i32 = arith.constant 0 : i32
    return %arg0, %arg1 : i32, i32
  }
}

</mosaic_0001>

<llo_original>
// kernel: tpu_custom_call.1
$region0: #{tpu_custom_call.1}
  #allocation0 [shape = 'u32[]', space=smem, size = 0x4, offset = 0x4, fixed_abs, tag = 'smem constant byte address 0x4 - core index']
  #allocation1 [shape = 'u32[144,128]{1,0:T(1,128)}', space=vmem, size = 0x12000, scoped, tag = 'internal scratch']
  %s0 = inlined_call_operand.hbm [shape: f32[8,128], index: 0, kind: input, shape index: {}]
  %s1 = inlined_call_operand.hbm [shape: f32[128,128], index: 1, kind: input, shape index: {}]
  %s2 = inlined_call_operand.vmem [shape: f32[1,128], index: 2, kind: input, shape index: {}]
  %s3 = inlined_call_operand.hbm [shape: f32[8,128], index: 3, kind: output, shape index: {}]
  %s4 = sld [smem:[#allocation0]]
  $region38: #{tpu_custom_call.1} parent=0
    _
  %s6 = ssub.s32 1, %s4
  %s7 = scalar_select 0, %s6, %s4
  $region1: #{tpu_custom_call.1} parent=0
    #allocation2 [shape = 'u8[4096]{0}', space=vmem, size = 0x1000, scoped, tag = 'input window, operand 0, single buffered']
    #allocation3 [shape = 's32[1]{0}', space=sflag, size = 0x4, scoped, tag = 'scoped memory for tpu_custom_call.1']
    #allocation4 [shape = 's32[1]{0}', space=sflag, size = 0x4, scoped, tag = 'scoped memory for tpu_custom_call.1']
    #allocation5 [shape = 'u8[65536]{0}', space=vmem, size = 0x10000, scoped, tag = 'input window, operand 1, single buffered']
    #allocation6 [shape = 's32[1]{0}', space=sflag, size = 0x4, scoped, tag = 'scoped memory for tpu_custom_call.1']
    #allocation7 [shape = 'u8[4096]{0}', space=vmem, size = 0x1000, scoped, tag = 'output window, operand 0, single buffered']
    %8 = vsyncpa [#allocation3], 0
    %9 = vsyncpa [#allocation6], 0
    %10 = vsyncpa [#allocation4], 0
    // Predicated region
    $region2: #{tpu_custom_call.1} parent=1 // pred_check
      _
    $region3: #{tpu_custom_call.1} parent=1 // pred_check_branch
      %12 = sbr.rel (0) target = $region5
    $region4: #{tpu_custom_call.1} parent=1 // pred_region
      %s14 = ssub.s32 128, 128
      %15 = vsyncadd [#allocation3], %s14
      %s17 = sshll.u32 [#allocation2], 4
      %s18 = int_to_ptr.vmem [resolvable:$true] %s17
      %20 = dma.hbm_to_vmem [thread:$0]  %s0, 128, %s18, [#allocation3]
    $region5: #{tpu_custom_call.1} parent=1 // pred_fallthru
      _
    // Predicated region
    $region6: #{tpu_custom_call.1} parent=1 // pred_check
      _
    $region7: #{tpu_custom_call.1} parent=1 // pred_check_branch
      %22 = sbr.rel (0) target = $region9
    $region8: #{tpu_custom_call.1} parent=1 // pred_region
      %s24 = ssub.s32 2048, 2048
      %25 = vsyncadd [#allocation6], %s24
      %s26 = sshll.u32 [#allocation5], 4
      %s27 = int_to_ptr.vmem [resolvable:$true] %s26
      %32 = dma.hbm_to_vmem [thread:$0]  %s1, 2048, %s27, [#allocation6], 128, 128, 8
    $region9: #{tpu_custom_call.1} parent=1 // pred_fallthru
      _
    // Predicated region
    $region10: #{tpu_custom_call.1} parent=1 // pred_check
      _
    $region11: #{tpu_custom_call.1} parent=1 // pred_check_branch
      %34 = sbr.rel (0) target = $region13
    $region12: #{tpu_custom_call.1} parent=1 // pred_region
      _
    $region13: #{tpu_custom_call.1} parent=1 // pred_fallthru
      _
    // Predicated region
    $region14: #{tpu_custom_call.1} parent=1 // pred_check
      _
    $region15: #{tpu_custom_call.1} parent=1 // pred_check_branch
      %36 = sbr.rel (0) target = $region17
    $region16: #{tpu_custom_call.1} parent=1 // pred_region
      %37 = dma.done [#allocation3], 128
    $region17: #{tpu_custom_call.1} parent=1 // pred_fallthru
      _
    // Predicated region
    $region18: #{tpu_custom_call.1} parent=1 // pred_check
      _
    $region19: #{tpu_custom_call.1} parent=1 // pred_check_branch
      %39 = sbr.rel (0) target = $region21
    $region20: #{tpu_custom_call.1} parent=1 // pred_region
      %40 = dma.done [#allocation6], 2048
    $region21: #{tpu_custom_call.1} parent=1 // pred_fallthru
      _
    %p41 = scmp.eq.s32.totalorder 0, 0
    // Predicated region
    $region22: #{tpu_custom_call.1} parent=1 // pred_check
      %p42 = pneg %p41
    $region23: #{tpu_custom_call.1} parent=1 // pred_check_branch
      %44 = sbr.rel (%p42) target = $region25
    $region24: #{tpu_custom_call.1} parent=1 // pred_region
      %45 = vst [vmem:[#allocation7] sm:$0xff] 0.0
    $region25: #{tpu_custom_call.1} parent=1 // pred_fallthru
      _
    %v46 = vld [vmem:[#allocation7] sm:$0xff]
    %v47 = vld [vmem:[#allocation2] sm:$0xff]
    %v48 = vld [vmem:[#allocation5] sm:$0xff]
    %v49 = vld [vmem:[#allocation5 + $0x8] sm:$0xff]
    %v50 = vld [vmem:[#allocation5 + $0x10] sm:$0xff]
    %v51 = vld [vmem:[#allocation5 + $0x18] sm:$0xff]
    %v52 = vld [vmem:[#allocation5 + $0x20] sm:$0xff]
    %v53 = vld [vmem:[#allocation5 + $0x28] sm:$0xff]
    %v54 = vld [vmem:[#allocation5 + $0x30] sm:$0xff]
    %v55 = vld [vmem:[#allocation5 + $0x38] sm:$0xff]
    %v56 = vld [vmem:[#allocation5 + $0x40] sm:$0xff]
    %v57 = vld [vmem:[#allocation5 + $0x48] sm:$0xff]
    %v58 = vld [vmem:[#allocation5 + $0x50] sm:$0xff]
    %v59 = vld [vmem:[#allocation5 + $0x58] sm:$0xff]
    %v60 = vld [vmem:[#allocation5 + $0x60] sm:$0xff]
    %v61 = vld [vmem:[#allocation5 + $0x68] sm:$0xff]
    %v62 = vld [vmem:[#allocation5 + $0x70] sm:$0xff]
    %v63 = vld [vmem:[#allocation5 + $0x78] sm:$0xff]
    %64 = vmatprep.subr.mxu0 0.0
    %65 = vmatpush1.msra.mxu0 %v48
    %66 = vmatprep.subr.mxu0 0.0
    %67 = vmatpush1.msra.mxu0 %v49
    %68 = vmatprep.subr.mxu0 0.0
    %69 = vmatpush1.msra.mxu0 %v50
    %70 = vmatprep.subr.mxu0 0.0
    %71 = vmatpush1.msra.mxu0 %v51
    %72 = vmatprep.subr.mxu0 0.0
    %73 = vmatpush1.msra.mxu0 %v52
    %74 = vmatprep.subr.mxu0 0.0
    %75 = vmatpush1.msra.mxu0 %v53
    %76 = vmatprep.subr.mxu0 0.0
    %77 = vmatpush1.msra.mxu0 %v54
    %78 = vmatprep.subr.mxu0 0.0
    %79 = vmatpush1.msra.mxu0 %v55
    %80 = vmatprep.subr.mxu0 0.0
    %81 = vmatpush1.msra.mxu0 %v56
    %82 = vmatprep.subr.mxu0 0.0
    %83 = vmatpush1.msra.mxu0 %v57
    %84 = vmatprep.subr.mxu0 0.0
    %85 = vmatpush1.msra.mxu0 %v58
    %86 = vmatprep.subr.mxu0 0.0
    %87 = vmatpush1.msra.mxu0 %v59
    %88 = vmatprep.subr.mxu0 0.0
    %89 = vmatpush1.msra.mxu0 %v60
    %90 = vmatprep.subr.mxu0 0.0
    %91 = vmatpush1.msra.mxu0 %v61
    %92 = vmatprep.subr.mxu0 0.0
    %93 = vmatpush1.msra.mxu0 %v62
    %94 = vmatprep.subr.mxu0 0.0
    %95 = vmatpush1.msra.mxu0 %v63
    %96 = vmatprep.subr.mxu0 0.0
    %97 = vmatpush1.msra.mxu0 0.0
    %98 = vmatprep.subr.mxu0 0.0
    %99 = vmatpush1.msra.mxu0 0.0
    %100 = vmatprep.subr.mxu0 0.0
    %101 = vmatpush1.msra.mxu0 0.0
    %102 = vmatprep.subr.mxu0 0.0
    %103 = vmatpush1.msra.mxu0 0.0
    %104 = vmatprep.subr.mxu0 0.0
    %105 = vmatpush1.msra.mxu0 0.0
    %106 = vmatprep.subr.mxu0 0.0
    %107 = vmatpush1.msra.mxu0 0.0
    %108 = vmatprep.subr.mxu0 0.0
    %109 = vmatpush1.msra.mxu0 0.0
    %110 = vmatprep.subr.mxu0 0.0
    %111 = vmatpush1.msra.mxu0 0.0
    %112 = vmatprep.subr.mxu0 0.0
    %113 = vmatpush1.msra.mxu0 0.0
    %114 = vmatprep.subr.mxu0 0.0
    %115 = vmatpush1.msra.mxu0 0.0
    %116 = vmatprep.subr.mxu0 0.0
    %117 = vmatpush1.msra.mxu0 0.0
    %118 = vmatprep.subr.mxu0 0.0
    %119 = vmatpush1.msra.mxu0 0.0
    %120 = vmatprep.subr.mxu0 0.0
    %121 = vmatpush1.msra.mxu0 0.0
    %122 = vmatprep.subr.mxu0 0.0
    %123 = vmatpush1.msra.mxu0 0.0
    %124 = vmatprep.subr.mxu0 0.0
    %125 = vmatpush1.msra.mxu0 0.0
    %126 = vmatprep.subr.mxu0 0.0
    %127 = vmatpush1.msra.mxu0 0.0
    %128 = vmatprep.mubr.f32.mxu0 0.0
    %129 = vmatmul.mubr.f32.gmra.mrb[0].mxu0 %v47
    %v130 = vpop.f32.mrb[0].mxu0
    %v131 = vadd.f32 0.0, %v130
    %v132 = vpop.f32.mrb[0].mxu0
    %133 = vdwg.mxu0
    %v134 = vadd.f32 %v46, %v131
    %135 = vst [vmem:[#allocation7] sm:$0xff] %v134
    // Predicated region
    $region26: #{tpu_custom_call.1} parent=1 // pred_check
      %p136 = pneg %p41
    $region27: #{tpu_custom_call.1} parent=1 // pred_check_branch
      %138 = sbr.rel (%p136) target = $region29
    $region28: #{tpu_custom_call.1} parent=1 // pred_region
      %v139 = vld [vmem:[#allocation7] sm:$0xff]
      %v140 = vld [vmem:[%s2] sm:$0x1]
      %v142 = vlaneseq
      %v143 = vshrl.u32 %v142, 7
      %v144 = vsub.s32 0, %v143
      %v145 = vrot.slane %v140, %v144
      %v147 = vadd.f32 %v139, %v145
      %v148 = vmax.f32 %v147, 0.0
      %149 = vst [vmem:[#allocation7] sm:$0xff] %v148
    $region29: #{tpu_custom_call.1} parent=1 // pred_fallthru
      _
    // Predicated region
    $region30: #{tpu_custom_call.1} parent=1 // pred_check
      _
    $region31: #{tpu_custom_call.1} parent=1 // pred_check_branch
      %151 = sbr.rel (0) target = $region33
    $region32: #{tpu_custom_call.1} parent=1 // pred_region
      %s153 = ssub.s32 128, 128
      %154 = vsyncadd [#allocation4], %s153
      %s156 = sshll.u32 [#allocation7], 4
      %s157 = int_to_ptr.vmem [resolvable:$true] %s156
      %159 = dma.vmem_to_hbm [thread:$0]  %s157, 128, %s3, [#allocation4]
    $region33: #{tpu_custom_call.1} parent=1 // pred_fallthru
      _
    // Predicated region
    $region34: #{tpu_custom_call.1} parent=1 // pred_check
      _
    $region35: #{tpu_custom_call.1} parent=1 // pred_check_branch
      %161 = sbr.rel (0) target = $region37
    $region36: #{tpu_custom_call.1} parent=1 // pred_region
      %162 = dma.done [#allocation4], 128
    $region37: #{tpu_custom_call.1} parent=1 // pred_fallthru
      _
    %163 = vsyncpa [#allocation3], 1
    %164 = vsyncpa [#allocation6], 1
    %165 = vsyncpa [#allocation4], 1

</llo_original>
